<compile_context>
chip_gen: v7x
topology: tpu7x:2x2x1
jax: 0.10.0
libtpu: 0.0.40
codegen_flags: <defaults>
</compile_context>

<pallas_src>
import jax
import jax.numpy as jnp
import numpy as np
from jax.experimental import pallas as pl
from jax.experimental.pallas import tpu as pltpu


def ms_block_kernel(x_ref, p_ref, w_ref, b_ref, u_ref, out_ref):
    x = x_ref[0]                                                      # (Cin, L)
    # AvgPool (divisor already folded into P)
    pooled = jnp.dot(x, p_ref[...], preferred_element_type=jnp.float32)   # (Cin, Lp)
    # 1x1 conv + bias + ReLU
    y = jnp.dot(w_ref[...], pooled, preferred_element_type=jnp.float32)   # (Cout, Lp)
    y = jnp.maximum(y + b_ref[...], 0.0)
    # nearest-neighbour resize along the text axis (0/1 selection matrix)
    out_ref[0] = jnp.dot(y, u_ref[...], preferred_element_type=jnp.float32)  # (Cout, T)


def _pool_matrix(L, K):
    """(L, Lp) matrix implementing AvgPool over length: kernel=K, stride=K,
    no padding, ceil_mode=False (tail rows beyond Lp*K are dropped)."""
    Lp = L // K
    P = np.zeros((L, Lp), np.float32)
    for p in range(Lp):
        P[p * K:(p + 1) * K, p] = 1.0 / K
    return jnp.asarray(P), Lp


def _nearest_matrix(Lp, T):
    """(Lp, T) 0/1 matrix implementing F.interpolate(mode='nearest') along H:
    src(t) = min(floor(t * Lp / T), Lp - 1)."""
    src = np.minimum(np.floor(np.arange(T) * (Lp / T)).astype(np.int64), Lp - 1)
    U = np.zeros((Lp, T), np.float32)
    U[src, np.arange(T)] = 1.0
    return jnp.asarray(U)


def ms_block_forward(x_nchw, conv_w, conv_b, pool_level, txt_length):
    """x_nchw: (N, Cin, H, W) f32. Returns (N, Cout, txt_length, 1) f32."""
    x_nchw = x_nchw.astype(jnp.float32)
    N, Cin, H, W = x_nchw.shape
    Cout = conv_w.shape[0]
    K = 5 * pool_level

    # The width pooling kernel is 1 and the conv is 1x1, so every output column
    # depends on exactly one input column; nearest-resize to width 1 selects
    # column floor(0 * W / 1) = 0 -> only input column 0 contributes.
    x = x_nchw[:, :, :, 0]                                           # (N, Cin, H)

    P, Lp = _pool_matrix(H, K)
    U = _nearest_matrix(Lp, txt_length)
    w = conv_w.reshape(Cout, Cin).astype(jnp.float32)                # (Cout, Cin)
    b = conv_b.reshape(Cout, 1).astype(jnp.float32)                  # (Cout, 1)

    out = pl.pallas_call(
        ms_block_kernel,
        out_shape=jax.ShapeDtypeStruct((N, Cout, txt_length), jnp.float32),
        grid_spec=pltpu.PrefetchScalarGridSpec(
            num_scalar_prefetch=0,
            grid=(N,),
            in_specs=[
                pl.BlockSpec((1, Cin, H), lambda n: (n, 0, 0)),
                pl.BlockSpec((H, Lp), lambda n: (0, 0)),
                pl.BlockSpec((Cout, Cin), lambda n: (0, 0)),
                pl.BlockSpec((Cout, 1), lambda n: (0, 0)),
                pl.BlockSpec((Lp, txt_length), lambda n: (0, 0)),
            ],
            out_specs=pl.BlockSpec((1, Cout, txt_length), lambda n: (n, 0, 0)),
        ),
        compiler_params=pltpu.CompilerParams(
            dimension_semantics=("parallel",)),
    )(x, P, w, b, U)

    return out[:, :, :, None]                                        # (N, Cout, T, 1)


def reference_forward(x, conv_w, conv_b, pool_level, txt_length):
    """Plain-JAX NCHW reference matching the PyTorch MS_Block forward."""
    N, C, H, W = x.shape
    K = 5 * pool_level
    Hp = H // K
    # AvgPool2d(kernel=(K,1), stride=(K,1)), ceil_mode=False
    xp = x[:, :, :Hp * K, :].reshape(N, C, Hp, K, W).mean(axis=3)    # (N, C, Hp, W)
    # 1x1 conv + bias
    w = conv_w.reshape(conv_w.shape[0], C)
    y = jnp.einsum('oc,nchw->nohw', w, xp) + conv_b.reshape(1, -1, 1, 1)
    y = jax.nn.relu(y)
    # F.interpolate(size=(txt_length, 1), mode='nearest')
    src_h = np.minimum(np.floor(np.arange(txt_length) * (Hp / txt_length)).astype(np.int32),
                       Hp - 1)
    src_w = np.minimum(np.floor(np.arange(1) * float(W)).astype(np.int32), W - 1)
    return y[:, :, src_h, :][:, :, :, src_w]


if __name__ == "__main__":
    # Small, module-consistent shapes: text tensor (N, Cin, H, 1).
    N, in_channel, out_channel = 2, 4, 8
    pool_level, txt_length = 1, 16
    H, W = 42, 1            # 42 // 5 = 8 pooled positions (tail of 2 rows dropped)

    key = jax.random.PRNGKey(0)
    kx, kw, kb = jax.random.split(key, 3)
    x = jax.random.normal(kx, (N, in_channel, H, W), jnp.float32)
    conv_w = 0.1 * jax.random.normal(kw, (out_channel, in_channel, 1, 1), jnp.float32)
    conv_b = 0.1 * jax.random.normal(kb, (out_channel,), jnp.float32)

    out = ms_block_forward(x, conv_w, conv_b, pool_level, txt_length)
    out = jax.block_until_ready(out)

    ref = jax.block_until_ready(
        reference_forward(x, conv_w, conv_b, pool_level, txt_length))
    np.testing.assert_allclose(np.asarray(out), np.asarray(ref),
                               rtol=1e-4, atol=1e-5)
    print("KERNEL_OK")
</pallas_src>

<mosaic_0001>
module attributes {stable_mosaic.version = 11 : i64} {
  func.func @ms_block_kernel(%arg0: i32, %arg1: memref<1x4x42xf32, #tpu.memory_space<vmem>>, %arg2: memref<42x8xf32, #tpu.memory_space<vmem>>, %arg3: memref<8x4xf32, #tpu.memory_space<vmem>>, %arg4: memref<8x1xf32, #tpu.memory_space<vmem>>, %arg5: memref<8x16xf32, #tpu.memory_space<vmem>>, %arg6: memref<1x8x16xf32, #tpu.memory_space<vmem>>) attributes {dimension_semantics = [#tpu.dimension_semantics<parallel>], iteration_bounds = array<i64: 2>, scalar_prefetch = 0 : i64, scratch_operands = 0 : i64, tpu.core_type = #tpu.core_type<tc>, window_params = [{transform_indices = @transform_0, window_bounds = array<i64: 1, 4, 42>}, {pipeline_mode = #tpu.pipeline_mode<synchronous>, transform_indices = @transform_1, window_bounds = array<i64: 42, 8>}, {pipeline_mode = #tpu.pipeline_mode<synchronous>, transform_indices = @transform_2, window_bounds = array<i64: 8, 4>}, {pipeline_mode = #tpu.pipeline_mode<synchronous>, transform_indices = @transform_3, window_bounds = array<i64: 8, 1>}, {pipeline_mode = #tpu.pipeline_mode<synchronous>, transform_indices = @transform_4, window_bounds = array<i64: 8, 16>}, {transform_indices = @transform_5, window_bounds = array<i64: 1, 8, 16>}]} {
    %c0 = arith.constant 0 : index
    %c0_0 = arith.constant 0 : index
    %c0_1 = arith.constant 0 : index
    %0 = vector.load %arg1[%c0, %c0_0, %c0_1] : memref<1x4x42xf32, #tpu.memory_space<vmem>>, vector<1x4x42xf32>
    %1 = vector.shape_cast %0 : vector<1x4x42xf32> to vector<4x42xf32>
    %c0_2 = arith.constant 0 : index
    %c0_3 = arith.constant 0 : index
    %2 = vector.load %arg2[%c0_2, %c0_3] : memref<42x8xf32, #tpu.memory_space<vmem>>, vector<42x8xf32>
    %cst = arith.constant dense<0.000000e+00> : vector<4x8xf32>
    %3 = tpu.matmul %1, %2, %cst {dimension_numbers = #tpu.dot_dimension_numbers<[1], [0], [0], [1], [0, 0, 1, 1], [], []>} : vector<4x42xf32>, vector<42x8xf32>, vector<4x8xf32> -> vector<4x8xf32>
    %c0_4 = arith.constant 0 : index
    %c0_5 = arith.constant 0 : index
    %4 = vector.load %arg3[%c0_4, %c0_5] : memref<8x4xf32, #tpu.memory_space<vmem>>, vector<8x4xf32>
    %cst_6 = arith.constant dense<0.000000e+00> : vector<8x8xf32>
    %5 = tpu.matmul %4, %3, %cst_6 {dimension_numbers = #tpu.dot_dimension_numbers<[1], [0], [0], [1], [0, 0, 1, 1], [], []>} : vector<8x4xf32>, vector<4x8xf32>, vector<8x8xf32> -> vector<8x8xf32>
    %c0_7 = arith.constant 0 : index
    %c0_8 = arith.constant 0 : index
    %6 = vector.load %arg4[%c0_7, %c0_8] : memref<8x1xf32, #tpu.memory_space<vmem>>, vector<8x1xf32>
    %7 = vector.broadcast %6 : vector<8x1xf32> to vector<8x8xf32>
    %8 = arith.addf %5, %7 : vector<8x8xf32>
    %cst_9 = arith.constant 0.000000e+00 : f32
    %9 = vector.broadcast %cst_9 : f32 to vector<8x8xf32>
    %10 = arith.maximumf %8, %9 : vector<8x8xf32>
    %c0_10 = arith.constant 0 : index
    %c0_11 = arith.constant 0 : index
    %11 = vector.load %arg5[%c0_10, %c0_11] : memref<8x16xf32, #tpu.memory_space<vmem>>, vector<8x16xf32>
    %cst_12 = arith.constant dense<0.000000e+00> : vector<8x16xf32>
    %12 = tpu.matmul %10, %11, %cst_12 {dimension_numbers = #tpu.dot_dimension_numbers<[1], [0], [0], [1], [0, 0, 1, 1], [], []>} : vector<8x8xf32>, vector<8x16xf32>, vector<8x16xf32> -> vector<8x16xf32>
    %c0_13 = arith.constant 0 : index
    %c0_14 = arith.constant 0 : index
    %c0_15 = arith.constant 0 : index
    %13 = vector.load %arg6[%c0_13, %c0_14, %c0_15] : memref<1x8x16xf32, #tpu.memory_space<vmem>>, vector<1x8x16xf32>
    %14 = vector.shape_cast %13 : vector<1x8x16xf32> to vector<8x16xf32>
    %15 = vector.shape_cast %12 : vector<8x16xf32> to vector<1x8x16xf32>
    tpu.vector_store %arg6[%c0_13, %c0_14, %c0_15], %15 {strides = array<i32>} : memref<1x8x16xf32, #tpu.memory_space<vmem>>, vector<1x8x16xf32>,
    return
  }
  func.func @transform_0(%arg0: i32) -> (i32, i32, i32) {
    %c0_i32 = arith.constant 0 : i32
    %c0_i32_0 = arith.constant 0 : i32
    %c0_i32_1 = arith.constant 0 : i32
    return %arg0, %c0_i32, %c0_i32_0 : i32, i32, i32
  }
  func.func @transform_1(%arg0: i32) -> (i32, i32) {
    %c0_i32 = arith.constant 0 : i32
    %c0_i32_0 = arith.constant 0 : i32
    %c0_i32_1 = arith.constant 0 : i32
    return %c0_i32, %c0_i32_0 : i32, i32
  }
  func.func @transform_2(%arg0: i32) -> (i32, i32) {
    %c0_i32 = arith.constant 0 : i32
    %c0_i32_0 = arith.constant 0 : i32
    %c0_i32_1 = arith.constant 0 : i32
    return %c0_i32, %c0_i32_0 : i32, i32
  }
  func.func @transform_3(%arg0: i32) -> (i32, i32) {
    %c0_i32 = arith.constant 0 : i32
    %c0_i32_0 = arith.constant 0 : i32
    %c0_i32_1 = arith.constant 0 : i32
    return %c0_i32, %c0_i32_0 : i32, i32
  }
  func.func @transform_4(%arg0: i32) -> (i32, i32) {
    %c0_i32 = arith.constant 0 : i32
    %c0_i32_0 = arith.constant 0 : i32
    %c0_i32_1 = arith.constant 0 : i32
    return %c0_i32, %c0_i32_0 : i32, i32
  }
  func.func @transform_5(%arg0: i32) -> (i32, i32, i32) {
    %c0_i32 = arith.constant 0 : i32
    %c0_i32_0 = arith.constant 0 : i32
    %c0_i32_1 = arith.constant 0 : i32
    return %arg0, %c0_i32, %c0_i32_0 : i32, i32, i32
  }
}

</mosaic_0001>

<llo_original>
// kernel: tpu_custom_call.1
$region0: #{tpu_custom_call.1}
  #allocation0 [shape = 'u32[]', space=smem, size = 0x4, offset = 0x4, fixed_abs, tag = 'smem constant byte address 0x4 - core index']
  #allocation1 [shape = 'u32[144,128]{1,0:T(1,128)}', space=vmem, size = 0x12000, scoped, tag = 'internal scratch']
  %s0 = inlined_call_operand.vmem [shape: f32[2,4,42], index: 0, kind: input, shape index: {}]
  %s1 = inlined_call_operand.vmem [shape: f32[42,8], index: 1, kind: input, shape index: {}]
  %s2 = inlined_call_operand.vmem [shape: f32[8,4], index: 2, kind: input, shape index: {}]
  %s3 = inlined_call_operand.vmem [shape: f32[8,1], index: 3, kind: input, shape index: {}]
  %s4 = inlined_call_operand.vmem [shape: f32[8,16], index: 4, kind: input, shape index: {}]
  %s5 = inlined_call_operand.hbm [shape: f32[2,8,16], index: 5, kind: output, shape index: {}]
  %s6 = sld [smem:[#allocation0]]
  $region53: #{tpu_custom_call.1} parent=0
    _
  %s8 = ssub.s32 1, %s6
  %s9 = scalar_select 0, %s8, %s6
  $region1: #{tpu_custom_call.1} parent=0
    #allocation2 [shape = 'u8[8192]{0}', space=vmem, size = 0x2000, scoped, tag = 'output window, operand 0']
    #allocation3 [shape = 's32[2]{0}', space=sflag, size = 0x8, scoped, tag = 'scoped memory for tpu_custom_call.1']
    %10 = vsyncpa [#allocation3], 0
    %s11 = scalar_lea.sflag [#allocation3], 1
    %12 = vsyncpa %s11, 0
    loop: start=0, step=1, limit=4
    $region2: #{tpu_custom_call.1} parent=1 // loop_pre_header
      _
    $region3: #{tpu_custom_call.1} parent=1 // loop_header
      %s14 = sphi 0, %s18
      %p15 = scmp.ge.s32.totalorder %s14, 4
      %s24 = sphi 0, %s26
      %s27 = sphi 0, %s24
      %s28 = sphi 0, %s27
      %s44 = sphi 0, %s28
      %s48 = sphi 0, %s48
      %s50 = sphi 0, %s48
      %s51 = sphi 0, %s50
      %s65 = sphi 0, %s51
      %s69 = sphi 0, %s69
      %s71 = sphi 0, %s69
      %s72 = sphi 0, %s71
      %s86 = sphi 0, %s72
      %s90 = sphi 0, %s90
      %s92 = sphi 0, %s90
      %s93 = sphi 0, %s92
      %s107 = sphi 0, %s93
      %s111 = sphi 0, %s111
      %s113 = sphi 0, %s111
      %s114 = sphi 0, %s113
      %s128 = sphi 0, %s114
      %s134 = sphi 0, %s136
      %s137 = sphi 0, %s134
      %s138 = sphi 0, %s137
      %s154 = sphi 0, %s138
    $region4: #{tpu_custom_call.1} parent=1 // loop_header_branch
      %17 = sbr.rel (%p15) target = $region8
    $region5: #{tpu_custom_call.1} parent=1 // loop_body
      %s19 = ssub.s32 %s14, 1
      %s20 = ssub.s32 %s14, 2
      %s21 = sadd.s32 %s14, 1
      %s22 = ssub.s32 %s14, %s21
      %p23 = scmp.eq.s32.totalorder %s22, 0
      %s25 = sadd.s32 %s24, 1
      %s26 = scalar_select %p23, %s24, %s25
      %p29 = pneg %p23
      %p30 = scmp.eq.s32.totalorder %s14, 1
      %p31 = por %p29, %p30
      %p32 = scmp.ne.s32.totalorder %s24, %s27
      %p33 = scmp.eq.s32.totalorder %s14, 0
      %p34 = por %p32, %p33
      %p35 = scmp.ne.s32.totalorder %s24, %s27
      %p36 = scmp.eq.s32.totalorder %s19, 1
      %p37 = por %p35, %p36
      %p38 = scmp.ne.s32.totalorder %s27, %s28
      %p39 = scmp.eq.s32.totalorder %s19, 0
      %p40 = por %p38, %p39
      %p41 = scmp.ne.s32.totalorder %s27, %s28
      %p42 = scmp.eq.s32.totalorder %s20, 1
      %p43 = por %p41, %p42
      %p45 = scmp.ne.s32.totalorder %s28, %s44
      %p46 = scmp.eq.s32.totalorder %s20, 0
      %p47 = por %p45, %p46
      %s49 = sadd.s32 %s48, 1
      %p52 = scmp.eq.s32.totalorder %s14, 1
      %p53 = scmp.ne.s32.totalorder %s48, %s50
      %p54 = scmp.eq.s32.totalorder %s14, 0
      %p55 = por %p53, %p54
      %p56 = scmp.ne.s32.totalorder %s48, %s50
      %p57 = scmp.eq.s32.totalorder %s19, 1
      %p58 = por %p56, %p57
      %p59 = scmp.ne.s32.totalorder %s50, %s51
      %p60 = scmp.eq.s32.totalorder %s19, 0
      %p61 = por %p59, %p60
      %p62 = scmp.ne.s32.totalorder %s50, %s51
      %p63 = scmp.eq.s32.totalorder %s20, 1
      %p64 = por %p62, %p63
      %p66 = scmp.ne.s32.totalorder %s51, %s65
      %p67 = scmp.eq.s32.totalorder %s20, 0
      %p68 = por %p66, %p67
      %s70 = sadd.s32 %s69, 1
      %p73 = scmp.eq.s32.totalorder %s14, 1
      %p74 = scmp.ne.s32.totalorder %s69, %s71
      %p75 = scmp.eq.s32.totalorder %s14, 0
      %p76 = por %p74, %p75
      %p77 = scmp.ne.s32.totalorder %s69, %s71
      %p78 = scmp.eq.s32.totalorder %s19, 1
      %p79 = por %p77, %p78
      %p80 = scmp.ne.s32.totalorder %s71, %s72
      %p81 = scmp.eq.s32.totalorder %s19, 0
      %p82 = por %p80, %p81
      %p83 = scmp.ne.s32.totalorder %s71, %s72
      %p84 = scmp.eq.s32.totalorder %s20, 1
      %p85 = por %p83, %p84
      %p87 = scmp.ne.s32.totalorder %s72, %s86
      %p88 = scmp.eq.s32.totalorder %s20, 0
      %p89 = por %p87, %p88
      %s91 = sadd.s32 %s90, 1
      %p94 = scmp.eq.s32.totalorder %s14, 1
      %p95 = scmp.ne.s32.totalorder %s90, %s92
      %p96 = scmp.eq.s32.totalorder %s14, 0
      %p97 = por %p95, %p96
      %p98 = scmp.ne.s32.totalorder %s90, %s92
      %p99 = scmp.eq.s32.totalorder %s19, 1
      %p100 = por %p98, %p99
      %p101 = scmp.ne.s32.totalorder %s92, %s93
      %p102 = scmp.eq.s32.totalorder %s19, 0
      %p103 = por %p101, %p102
      %p104 = scmp.ne.s32.totalorder %s92, %s93
      %p105 = scmp.eq.s32.totalorder %s20, 1
      %p106 = por %p104, %p105
      %p108 = scmp.ne.s32.totalorder %s93, %s107
      %p109 = scmp.eq.s32.totalorder %s20, 0
      %p110 = por %p108, %p109
      %s112 = sadd.s32 %s111, 1
      %p115 = scmp.eq.s32.totalorder %s14, 1
      %p116 = scmp.ne.s32.totalorder %s111, %s113
      %p117 = scmp.eq.s32.totalorder %s14, 0
      %p118 = por %p116, %p117
      %p119 = scmp.ne.s32.totalorder %s111, %s113
      %p120 = scmp.eq.s32.totalorder %s19, 1
      %p121 = por %p119, %p120
      %p122 = scmp.ne.s32.totalorder %s113, %s114
      %p123 = scmp.eq.s32.totalorder %s19, 0
      %p124 = por %p122, %p123
      %p125 = scmp.ne.s32.totalorder %s113, %s114
      %p126 = scmp.eq.s32.totalorder %s20, 1
      %p127 = por %p125, %p126
      %p129 = scmp.ne.s32.totalorder %s114, %s128
      %p130 = scmp.eq.s32.totalorder %s20, 0
      %p131 = por %p129, %p130
      %s132 = ssub.s32 %s14, %s21
      %p133 = scmp.eq.s32.totalorder %s132, 0
      %s135 = sadd.s32 %s134, 1
      %s136 = scalar_select %p133, %s134, %s135
      %p139 = pneg %p133
      %p140 = scmp.eq.s32.totalorder %s14, 1
      %p141 = por %p139, %p140
      %p142 = scmp.ne.s32.totalorder %s134, %s137
      %p143 = scmp.eq.s32.totalorder %s14, 0
      %p144 = por %p142, %p143
      %p145 = scmp.ne.s32.totalorder %s134, %s137
      %p146 = scmp.eq.s32.totalorder %s19, 1
      %p147 = por %p145, %p146
      %p148 = scmp.ne.s32.totalorder %s137, %s138
      %p149 = scmp.eq.s32.totalorder %s19, 0
      %p150 = por %p148, %p149
      %p151 = scmp.ne.s32.totalorder %s137, %s138
      %p152 = scmp.eq.s32.totalorder %s20, 1
      %p153 = por %p151, %p152
      %p155 = scmp.ne.s32.totalorder %s138, %s154
      %p156 = scmp.eq.s32.totalorder %s20, 0
      %p157 = por %p155, %p156
      %p158 = scmp.le.s32.totalorder 1, %s14
      %p159 = scmp.lt.s32.totalorder %s14, 3
      %p160 = pnand %p158, %p159
      %p161 = pneg %p160
      // Predicated region
      $region9: #{tpu_custom_call.1} parent=5 // pred_check
        _
      $region10: #{tpu_custom_call.1} parent=5 // pred_check_branch
        %163 = sbr.rel (%p160) target = $region12
      $region11: #{tpu_custom_call.1} parent=5 // pred_region
        %s164 = ssub.s32 %s14, 1
        // Predicated region
        $region13: #{tpu_custom_call.1} parent=11 // pred_check
          %p165 = pneg %p61
        $region14: #{tpu_custom_call.1} parent=11 // pred_check_branch
          %167 = sbr.rel (%p165) target = $region16
        $region15: #{tpu_custom_call.1} parent=11 // pred_region
          _
        $region16: #{tpu_custom_call.1} parent=11 // pred_fallthru
          _
        // Predicated region
        $region17: #{tpu_custom_call.1} parent=11 // pred_check
          %p168 = pneg %p82
        $region18: #{tpu_custom_call.1} parent=11 // pred_check_branch
          %170 = sbr.rel (%p168) target = $region20
        $region19: #{tpu_custom_call.1} parent=11 // pred_region
          _
        $region20: #{tpu_custom_call.1} parent=11 // pred_fallthru
          _
        // Predicated region
        $region21: #{tpu_custom_call.1} parent=11 // pred_check
          %p171 = pneg %p103
        $region22: #{tpu_custom_call.1} parent=11 // pred_check_branch
          %173 = sbr.rel (%p171) target = $region24
        $region23: #{tpu_custom_call.1} parent=11 // pred_region
          _
        $region24: #{tpu_custom_call.1} parent=11 // pred_fallthru
          _
        // Predicated region
        $region25: #{tpu_custom_call.1} parent=11 // pred_check
          %p174 = pneg %p124
        $region26: #{tpu_custom_call.1} parent=11 // pred_check_branch
          %176 = sbr.rel (%p174) target = $region28
        $region27: #{tpu_custom_call.1} parent=11 // pred_region
          _
        $region28: #{tpu_custom_call.1} parent=11 // pred_fallthru
          _
      $region12: #{tpu_custom_call.1} parent=5 // pred_fallthru
        _
      %p177 = scmp.lt.s32.totalorder %s14, 2
      // Predicated region
      $region29: #{tpu_custom_call.1} parent=5 // pred_check
        %p178 = pneg %p177
      $region30: #{tpu_custom_call.1} parent=5 // pred_check_branch
        %180 = sbr.rel (%p178) target = $region32
      $region31: #{tpu_custom_call.1} parent=5 // pred_region
        // Predicated region
        $region33: #{tpu_custom_call.1} parent=31 // pred_check
          %p181 = pneg %p34
        $region34: #{tpu_custom_call.1} parent=31 // pred_check_branch
          %183 = sbr.rel (%p181) target = $region36
        $region35: #{tpu_custom_call.1} parent=31 // pred_region
          %p184 = scmp.lt.s32.totalorder %s14, 1
          %s185 = scalar_select %p184, %s14, 1
          %s186 = smul.addr %s185, 4
          %s187 = scalar_lea.vmem %s0, %s186
        $region36: #{tpu_custom_call.1} parent=31 // pred_fallthru
          _
      $region32: #{tpu_custom_call.1} parent=5 // pred_fallthru
        _
      %p188 = scmp.le.s32.totalorder 1, %s14
      %p189 = scmp.lt.s32.totalorder %s14, 3
      %p190 = pnand %p188, %p189
      %p191 = pneg %p190
      // Predicated region
      $region37: #{tpu_custom_call.1} parent=5 // pred_check
        _
      $region38: #{tpu_custom_call.1} parent=5 // pred_check_branch
        %193 = sbr.rel (%p190) target = $region40
      $region39: #{tpu_custom_call.1} parent=5 // pred_region
        %s194 = ssub.s32 %s14, 1
        %p195 = scmp.lt.s32.totalorder %s19, 1
        %s196 = scalar_select %p195, %s19, 1
        %s197 = smul.addr %s196, 4
        %s198 = scalar_lea.vmem %s0, %s197
        %p199 = pneg %p40
        %p200 = pneg %p37
        %p201 = pneg %p61
        %p202 = pneg %p58
        %p203 = pneg %p82
        %p204 = pneg %p79
        %p205 = pneg %p103
        %p206 = pneg %p100
        %p207 = pneg %p124
        %p208 = pneg %p121
        %p209 = pneg %p150
        %p210 = pneg %p147
        %s211 = sand.u32 %s137, 1
        %s212 = scalar_lea.sflag [#allocation3], %s211
        %s213 = sand.u32 %s137, 1
        %s214 = smul.addr %s213, 8
        %s215 = scalar_lea.vmem [#allocation2], %s214
        %p216 = scmp.lt.s32.totalorder %s19, 1
        %s217 = scalar_select %p216, %s19, 1
        %s218 = smul.addr %s217, 4
        %s219 = scalar_lea.vmem %s0, %s218
        %v220 = vld [vmem:[%s219] sm:$0xf]
        %v221 = vld [vmem:[%s1] sm:$0xff]
        %v222 = vld [vmem:[%s1 + $0x8] sm:$0xff]
        %v223 = vld [vmem:[%s1 + $0x10] sm:$0xff]
        %v224 = vld [vmem:[%s1 + $0x18] sm:$0xff]
        %v225 = vld [vmem:[%s1 + $0x20] sm:$0xff]
        %v226 = vld [vmem:[%s1 + $0x28] sm:$0x3]
        %vm227 = vcmask 343040
        %v229 = vsel %vm227, %v220, 0
        %vm231 = vcmask 1041408
        %v233 = vsel %vm231, %v226, 0
        %235 = vmatprep.subr.mxu0 0.0
        %236 = vmatpush1.msra.mxu0 %v221
        %237 = vmatprep.subr.mxu0 0.0
        %238 = vmatpush1.msra.mxu0 %v222
        %239 = vmatprep.subr.mxu0 0.0
        %240 = vmatpush1.msra.mxu0 %v223
        %241 = vmatprep.subr.mxu0 0.0
        %242 = vmatpush1.msra.mxu0 %v224
        %243 = vmatprep.subr.mxu0 0.0
        %244 = vmatpush1.msra.mxu0 %v225
        %245 = vmatprep.subr.mxu0 0.0
        %246 = vmatpush1.msra.mxu0 %v233
        %247 = vmatprep.subr.mxu0 0.0
        %248 = vmatpush1.msra.mxu0 0.0
        %249 = vmatprep.subr.mxu0 0.0
        %250 = vmatpush1.msra.mxu0 0.0
        %251 = vmatprep.subr.mxu0 0.0
        %252 = vmatpush1.msra.mxu0 0.0
        %253 = vmatprep.subr.mxu0 0.0
        %254 = vmatpush1.msra.mxu0 0.0
        %255 = vmatprep.subr.mxu0 0.0
        %256 = vmatpush1.msra.mxu0 0.0
        %257 = vmatprep.subr.mxu0 0.0
        %258 = vmatpush1.msra.mxu0 0.0
        %259 = vmatprep.subr.mxu0 0.0
        %260 = vmatpush1.msra.mxu0 0.0
        %261 = vmatprep.subr.mxu0 0.0
        %262 = vmatpush1.msra.mxu0 0.0
        %263 = vmatprep.subr.mxu0 0.0
        %264 = vmatpush1.msra.mxu0 0.0
        %265 = vmatprep.subr.mxu0 0.0
        %266 = vmatpush1.msra.mxu0 0.0
        %267 = vmatprep.subr.mxu0 0.0
        %268 = vmatpush1.msra.mxu0 0.0
        %269 = vmatprep.subr.mxu0 0.0
        %270 = vmatpush1.msra.mxu0 0.0
        %271 = vmatprep.subr.mxu0 0.0
        %272 = vmatpush1.msra.mxu0 0.0
        %273 = vmatprep.subr.mxu0 0.0
        %274 = vmatpush1.msra.mxu0 0.0
        %275 = vmatprep.subr.mxu0 0.0
        %276 = vmatpush1.msra.mxu0 0.0
        %277 = vmatprep.subr.mxu0 0.0
        %278 = vmatpush1.msra.mxu0 0.0
        %279 = vmatprep.subr.mxu0 0.0
        %280 = vmatpush1.msra.mxu0 0.0
        %281 = vmatprep.subr.mxu0 0.0
        %282 = vmatpush1.msra.mxu0 0.0
        %283 = vmatprep.subr.mxu0 0.0
        %284 = vmatpush1.msra.mxu0 0.0
        %285 = vmatprep.subr.mxu0 0.0
        %286 = vmatpush1.msra.mxu0 0.0
        %287 = vmatprep.subr.mxu0 0.0
        %288 = vmatpush1.msra.mxu0 0.0
        %289 = vmatprep.subr.mxu0 0.0
        %290 = vmatpush1.msra.mxu0 0.0
        %291 = vmatprep.subr.mxu0 0.0
        %292 = vmatpush1.msra.mxu0 0.0
        %293 = vmatprep.subr.mxu0 0.0
        %294 = vmatpush1.msra.mxu0 0.0
        %295 = vmatprep.subr.mxu0 0.0
        %296 = vmatpush1.msra.mxu0 0.0
        %297 = vmatprep.subr.mxu0 0.0
        %298 = vmatpush1.msra.mxu0 0.0
        %299 = vmatprep.mubr.f32.mxu0 0.0
        %300 = vmatmul.mubr.f32.gmra.mrb[0].mxu0 %v229
        %v301 = vpop.f32.mrb[0].mxu0
        %v302 = vadd.f32 0.0, %v301
        %v303 = vpop.f32.mrb[0].mxu0
        %304 = vdwg.mxu0
        %v305 = vld [vmem:[%s2] sm:$0xff]
        %v306 = vld [vmem:[%s3] sm:$0xff]
        %308 = vset.pattern.permute.xlu0 0
        %309 = vperm.xlu0 %308, %v306
        %v310 = vpop.permute.xlu0 %309
        %vm312 = vcmask 31744
        %v314 = vsel %vm312, %v305, 0
        %vm316 = vcmask 1043456
        %v318 = vsel %vm316, %v302, 0
        %320 = vmatprep.subr.mxu0 0.0
        %321 = vmatpush1.msra.mxu0 %v318
        %322 = vmatprep.subr.mxu0 0.0
        %323 = vmatpush1.msra.mxu0 0.0
        %324 = vmatprep.subr.mxu0 0.0
        %325 = vmatpush1.msra.mxu0 0.0
        %326 = vmatprep.subr.mxu0 0.0
        %327 = vmatpush1.msra.mxu0 0.0
        %328 = vmatprep.subr.mxu0 0.0
        %329 = vmatpush1.msra.mxu0 0.0
        %330 = vmatprep.subr.mxu0 0.0
        %331 = vmatpush1.msra.mxu0 0.0
        %332 = vmatprep.subr.mxu0 0.0
        %333 = vmatpush1.msra.mxu0 0.0
        %334 = vmatprep.subr.mxu0 0.0
        %335 = vmatpush1.msra.mxu0 0.0
        %336 = vmatprep.subr.mxu0 0.0
        %337 = vmatpush1.msra.mxu0 0.0
        %338 = vmatprep.subr.mxu0 0.0
        %339 = vmatpush1.msra.mxu0 0.0
        %340 = vmatprep.subr.mxu0 0.0
        %341 = vmatpush1.msra.mxu0 0.0
        %342 = vmatprep.subr.mxu0 0.0
        %343 = vmatpush1.msra.mxu0 0.0
        %344 = vmatprep.subr.mxu0 0.0
        %345 = vmatpush1.msra.mxu0 0.0
        %346 = vmatprep.subr.mxu0 0.0
        %347 = vmatpush1.msra.mxu0 0.0
        %348 = vmatprep.subr.mxu0 0.0
        %349 = vmatpush1.msra.mxu0 0.0
        %350 = vmatprep.subr.mxu0 0.0
        %351 = vmatpush1.msra.mxu0 0.0
        %352 = vmatprep.subr.mxu0 0.0
        %353 = vmatpush1.msra.mxu0 0.0
        %354 = vmatprep.subr.mxu0 0.0
        %355 = vmatpush1.msra.mxu0 0.0
        %356 = vmatprep.subr.mxu0 0.0
        %357 = vmatpush1.msra.mxu0 0.0
        %358 = vmatprep.subr.mxu0 0.0
        %359 = vmatpush1.msra.mxu0 0.0
        %360 = vmatprep.subr.mxu0 0.0
        %361 = vmatpush1.msra.mxu0 0.0
        %362 = vmatprep.subr.mxu0 0.0
        %363 = vmatpush1.msra.mxu0 0.0
        %364 = vmatprep.subr.mxu0 0.0
        %365 = vmatpush1.msra.mxu0 0.0
        %366 = vmatprep.subr.mxu0 0.0
        %367 = vmatpush1.msra.mxu0 0.0
        %368 = vmatprep.subr.mxu0 0.0
        %369 = vmatpush1.msra.mxu0 0.0
        %370 = vmatprep.subr.mxu0 0.0
        %371 = vmatpush1.msra.mxu0 0.0
        %372 = vmatprep.subr.mxu0 0.0
        %373 = vmatpush1.msra.mxu0 0.0
        %374 = vmatprep.subr.mxu0 0.0
        %375 = vmatpush1.msra.mxu0 0.0
        %376 = vmatprep.subr.mxu0 0.0
        %377 = vmatpush1.msra.mxu0 0.0
        %378 = vmatprep.subr.mxu0 0.0
        %379 = vmatpush1.msra.mxu0 0.0
        %380 = vmatprep.subr.mxu0 0.0
        %381 = vmatpush1.msra.mxu0 0.0
        %382 = vmatprep.subr.mxu0 0.0
        %383 = vmatpush1.msra.mxu0 0.0
        %384 = vmatprep.mubr.f32.mxu0 0.0
        %385 = vmatmul.mubr.f32.gmra.mrb[0].mxu0 %v314
        %v386 = vpop.f32.mrb[0].mxu0
        %v387 = vadd.f32 %v310, %v386
        %v388 = vpop.f32.mrb[0].mxu0
        %389 = vdwg.mxu0
        %v390 = vmax.f32 %v387, 0.0
        %v391 = vld [vmem:[%s4] sm:$0xff]
        %vm392 = vcmask 64512
        %v394 = vsel %vm392, %v390, 0
        %396 = vmatprep.subr.mxu0 0.0
        %397 = vmatpush1.msra.mxu0 %v391
        %398 = vmatprep.subr.mxu0 0.0
        %399 = vmatpush1.msra.mxu0 0.0
        %400 = vmatprep.subr.mxu0 0.0
        %401 = vmatpush1.msra.mxu0 0.0
        %402 = vmatprep.subr.mxu0 0.0
        %403 = vmatpush1.msra.mxu0 0.0
        %404 = vmatprep.subr.mxu0 0.0
        %405 = vmatpush1.msra.mxu0 0.0
        %406 = vmatprep.subr.mxu0 0.0
        %407 = vmatpush1.msra.mxu0 0.0
        %408 = vmatprep.subr.mxu0 0.0
        %409 = vmatpush1.msra.mxu0 0.0
        %410 = vmatprep.subr.mxu0 0.0
        %411 = vmatpush1.msra.mxu0 0.0
        %412 = vmatprep.subr.mxu0 0.0
        %413 = vmatpush1.msra.mxu0 0.0
        %414 = vmatprep.subr.mxu0 0.0
        %415 = vmatpush1.msra.mxu0 0.0
        %416 = vmatprep.subr.mxu0 0.0
        %417 = vmatpush1.msra.mxu0 0.0
        %418 = vmatprep.subr.mxu0 0.0
        %419 = vmatpush1.msra.mxu0 0.0
        %420 = vmatprep.subr.mxu0 0.0
        %421 = vmatpush1.msra.mxu0 0.0
        %422 = vmatprep.subr.mxu0 0.0
        %423 = vmatpush1.msra.mxu0 0.0
        %424 = vmatprep.subr.mxu0 0.0
        %425 = vmatpush1.msra.mxu0 0.0
        %426 = vmatprep.subr.mxu0 0.0
        %427 = vmatpush1.msra.mxu0 0.0
        %428 = vmatprep.subr.mxu0 0.0
        %429 = vmatpush1.msra.mxu0 0.0
        %430 = vmatprep.subr.mxu0 0.0
        %431 = vmatpush1.msra.mxu0 0.0
        %432 = vmatprep.subr.mxu0 0.0
        %433 = vmatpush1.msra.mxu0 0.0
        %434 = vmatprep.subr.mxu0 0.0
        %435 = vmatpush1.msra.mxu0 0.0
        %436 = vmatprep.subr.mxu0 0.0
        %437 = vmatpush1.msra.mxu0 0.0
        %438 = vmatprep.subr.mxu0 0.0
        %439 = vmatpush1.msra.mxu0 0.0
        %440 = vmatprep.subr.mxu0 0.0
        %441 = vmatpush1.msra.mxu0 0.0
        %442 = vmatprep.subr.mxu0 0.0
        %443 = vmatpush1.msra.mxu0 0.0
        %444 = vmatprep.subr.mxu0 0.0
        %445 = vmatpush1.msra.mxu0 0.0
        %446 = vmatprep.subr.mxu0 0.0
        %447 = vmatpush1.msra.mxu0 0.0
        %448 = vmatprep.subr.mxu0 0.0
        %449 = vmatpush1.msra.mxu0 0.0
        %450 = vmatprep.subr.mxu0 0.0
        %451 = vmatpush1.msra.mxu0 0.0
        %452 = vmatprep.subr.mxu0 0.0
        %453 = vmatpush1.msra.mxu0 0.0
        %454 = vmatprep.subr.mxu0 0.0
        %455 = vmatpush1.msra.mxu0 0.0
        %456 = vmatprep.subr.mxu0 0.0
        %457 = vmatpush1.msra.mxu0 0.0
        %458 = vmatprep.subr.mxu0 0.0
        %459 = vmatpush1.msra.mxu0 0.0
        %460 = vmatprep.mubr.f32.mxu0 0.0
        %461 = vmatmul.mubr.f32.gmra.mrb[0].mxu0 %v394
        %v462 = vpop.f32.mrb[0].mxu0
        %v463 = vadd.f32 0.0, %v462
        %v464 = vpop.f32.mrb[0].mxu0
        %465 = vdwg.mxu0
        %vm466 = vcmask 130048
        %467 = vst.msk [vmem:[%s215] sm:$0xff] %vm466, %v463
        %s468 = sand.u32 %s137, 1
        %s469 = scalar_lea.sflag [#allocation3], %s468
        %s470 = sand.u32 %s137, 1
        %s471 = smul.addr %s470, 8
        %s472 = scalar_lea.vmem [#allocation2], %s471
        // Predicated region
        $region41: #{tpu_custom_call.1} parent=39 // pred_check
          %p473 = pneg %p147
        $region42: #{tpu_custom_call.1} parent=39 // pred_check_branch
          %475 = sbr.rel (%p473) target = $region44
        $region43: #{tpu_custom_call.1} parent=39 // pred_region
          %s477 = ssub.s32 128, 128
          %478 = vsyncadd %s469, %s477
          %s479 = smul.addr %s19, 128
          %s480 = scalar_lea.hbm %s5, %s479
          %s482 = sshll.u32 %s472, 4
          %s483 = int_to_ptr.vmem [resolvable:$true] %s482
          %485 = dma.vmem_to_hbm [thread:$0]  %s483, 128, %s480, %s469
        $region44: #{tpu_custom_call.1} parent=39 // pred_fallthru
          _
      $region40: #{tpu_custom_call.1} parent=5 // pred_fallthru
        _
      %p486 = scmp.le.s32.totalorder 2, %s14
      // Predicated region
      $region45: #{tpu_custom_call.1} parent=5 // pred_check
        %p487 = pneg %p486
      $region46: #{tpu_custom_call.1} parent=5 // pred_check_branch
        %489 = sbr.rel (%p487) target = $region48
      $region47: #{tpu_custom_call.1} parent=5 // pred_region
        %s490 = ssub.s32 %s14, 2
        // Predicated region
        $region49: #{tpu_custom_call.1} parent=47 // pred_check
          %p491 = pneg %p153
        $region50: #{tpu_custom_call.1} parent=47 // pred_check_branch
          %493 = sbr.rel (%p491) target = $region52
        $region51: #{tpu_custom_call.1} parent=47 // pred_region
          %s494 = sand.u32 %s138, 1
          %s495 = scalar_lea.sflag [#allocation3], %s494
          %s496 = sand.u32 %s138, 1
          %s497 = smul.addr %s496, 8
          %s498 = scalar_lea.vmem [#allocation2], %s497
          %499 = dma.done %s495, 128
        $region52: #{tpu_custom_call.1} parent=47 // pred_fallthru
          _
      $region48: #{tpu_custom_call.1} parent=5 // pred_fallthru
        _
    $region6: #{tpu_custom_call.1} parent=1 // loop_footer
      %s18 = sadd.s32 1, %s14
    $region7: #{tpu_custom_call.1} parent=1 // loop_footer_branch
      %13 = sbr.rel target = $region3
    $region8: #{tpu_custom_call.1} parent=1 // loop_exit
      _
    %500 = vsyncpa [#allocation3], 1
    %s501 = scalar_lea.sflag [#allocation3], 1
    %502 = vsyncpa %s501, 1

</llo_original>
